<compile_context>
chip_gen: v5e
topology: v5e:2x2
jax: 0.10.0
libtpu: 0.0.40
codegen_flags: <defaults>
</compile_context>

<pallas_src>
import math

import jax
import jax.numpy as jnp
from jax.experimental import pallas as pl
from jax.experimental.pallas import tpu as pltpu


def _make_kernel(x_scale: float):
    # x_scale is a plain Python float -> becomes a literal in the trace
    # (no captured tracer constants).
    def kernel(x_ref, pe_ref, o_ref):
        # x_ref / o_ref : VMEM (B, tT, D) tiles of the input / output
        # pe_ref        : VMEM (1, tT, D) f32 tile of the precomputed PE slab
        y = x_ref[...].astype(jnp.float32) * x_scale + pe_ref[...]
        o_ref[...] = y.astype(o_ref.dtype)

    return kernel


def _choose_time_tile(B: int, T: int, D: int, itemsize: int,
                      vmem_budget_bytes: int = 16 << 20) -> int:
    """Largest tT whose double-buffered footprint fits the VMEM budget.

    Footprint per time-row:
      2 x (x block) + 2 x (out block)  = 4 * B * D * itemsize
      2 x (pe block, f32)              = 8 * D
    tT is aligned to the sublane packing for the input dtype.
    """
    per_row = 4 * B * D * itemsize + 8 * D
    tT_max = max(1, vmem_budget_bytes // per_row)
    if tT_max >= T:
        return T
    align = max(8, 32 // max(1, itemsize))      # 8 f32 / 16 bf16 / 32 int8
    tT = max(align, (tT_max // align) * align)
    return min(tT, T)


def sinusoidal_positional_encoding(x: jax.Array,
                                   offset: int = 0,
                                   dropout_rate: float = 0.0,
                                   max_length: int = 5000) -> jax.Array:
    """Pallas TPU implementation of SinusoidalPositionalEncoding.forward.

    x: (B, T, D). Returns x * sqrt(D) + PE[offset:offset+T], same dtype as x.
    """
    B, T, D = x.shape
    assert offset + T < max_length, "offset + size must be < max_length"
    assert D % 2 == 0, "embedding_dim must be even (sin/cos interleave)"
    # NOTE: D should be a multiple of 128 for lane-dense (unmasked) stores.
    x_scale = math.sqrt(float(D))
    itemsize = jnp.dtype(x.dtype).itemsize

    # Precompute PE[offset:offset+T] on the host / via XLA (offset is static).
    # Interleaved exactly like the PyTorch module: even cols sin, odd cols cos.
    pos = jnp.arange(offset, offset + T, dtype=jnp.float32)[:, None]      # (T,1)
    div_term = jnp.exp(jnp.arange(0, D, 2, dtype=jnp.float32)
                       * (-math.log(10000.0) / float(D)))                 # (D/2,)
    angles = pos * div_term                                               # (T,D/2)
    pe = jnp.stack([jnp.sin(angles), jnp.cos(angles)], axis=-1)           # (T,D/2,2)
    pe = pe.reshape(T, D)[None, :, :].astype(jnp.float32)                 # (1,T,D)

    tT = _choose_time_tile(B, T, D, itemsize)
    num_t = pl.cdiv(T, tT)

    cost = pl.CostEstimate(
        flops=2 * B * T * D,                                   # mul + add
        transcendentals=0,                                     # sin precomputed
        bytes_accessed=2 * B * T * D * itemsize + T * D * 4,   # x in/out + pe
    )

    out = pl.pallas_call(
        _make_kernel(x_scale),
        out_shape=jax.ShapeDtypeStruct((B, T, D), x.dtype),
        grid_spec=pltpu.PrefetchScalarGridSpec(
            num_scalar_prefetch=0,
            grid=(num_t,),                                       # T tiles only
            in_specs=[
                pl.BlockSpec((B, tT, D), lambda t: (0, t, 0)),   # x
                pl.BlockSpec((1, tT, D), lambda t: (0, t, 0)),   # pe slab
            ],
            out_specs=pl.BlockSpec((B, tT, D), lambda t: (0, t, 0)),
        ),
        compiler_params=pltpu.CompilerParams(
            dimension_semantics=("parallel",),
            vmem_limit_bytes=48 << 20,    # headroom for the ~16 MiB block budget
        ),
        cost_estimate=cost,
    )(x, pe)

    # TODO(synk): dropout is stochastic training-time behavior; kernel implements
    # the deterministic (eval / identity-dropout) path.
    return out


def _reference(x: jax.Array, offset: int = 0) -> jax.Array:
    """Pure-JAX reference mirroring the PyTorch module (dropout=identity)."""
    B, T, D = x.shape
    pos = jnp.arange(offset, offset + T, dtype=jnp.float32)[:, None]
    div_term = jnp.exp(
        jnp.arange(0, D, 2, dtype=jnp.float32) * (-math.log(10000.0) / D))
    pe = jnp.zeros((T, D), dtype=jnp.float32)
    pe = pe.at[:, 0::2].set(jnp.sin(pos * div_term))
    pe = pe.at[:, 1::2].set(jnp.cos(pos * div_term))
    return (x.astype(jnp.float32) * math.sqrt(float(D))
            + pe[None, :, :]).astype(x.dtype)


if __name__ == "__main__":
    key = jax.random.PRNGKey(0)
    # Small shapes consistent with (batch, seq, hidden); D=128 keeps the
    # output lane-dense (last dim a multiple of 128).
    B, T, D = 2, 16, 128
    x = jax.random.normal(key, (B, T, D), dtype=jnp.float32)

    offset = 3
    y = sinusoidal_positional_encoding(x, offset=offset, dropout_rate=0.1)
    y = jax.block_until_ready(y)

    y_ref = _reference(x, offset=offset)
    assert y.shape == y_ref.shape and y.dtype == y_ref.dtype
    assert jnp.allclose(y, y_ref, atol=1e-5, rtol=1e-5), "mismatch vs reference"

    print("KERNEL_OK")
</pallas_src>

<mosaic_0001>
module attributes {stable_mosaic.version = 11 : i64} {
  func.func @kernel(%arg0: i32, %arg1: memref<2x16x128xf32, #tpu.memory_space<vmem>>, %arg2: memref<1x16x128xf32, #tpu.memory_space<vmem>>, %arg3: memref<2x16x128xf32, #tpu.memory_space<vmem>>) attributes {dimension_semantics = [#tpu.dimension_semantics<parallel>], iteration_bounds = array<i64: 1>, scalar_prefetch = 0 : i64, scratch_operands = 0 : i64, tpu.core_type = #tpu.core_type<tc>, window_params = [{transform_indices = @transform_0, window_bounds = array<i64: 2, 16, 128>}, {transform_indices = @transform_1, window_bounds = array<i64: 1, 16, 128>}, {transform_indices = @transform_2, window_bounds = array<i64: 2, 16, 128>}]} {
    %c0 = arith.constant 0 : index
    %c0_0 = arith.constant 0 : index
    %c0_1 = arith.constant 0 : index
    %0 = vector.load %arg1[%c0, %c0_0, %c0_1] : memref<2x16x128xf32, #tpu.memory_space<vmem>>, vector<2x16x128xf32>
    %cst = arith.constant 11.3137083 : f32
    %1 = vector.broadcast %cst : f32 to vector<2x16x128xf32>
    %2 = arith.mulf %0, %1 : vector<2x16x128xf32>
    %c0_2 = arith.constant 0 : index
    %c0_3 = arith.constant 0 : index
    %c0_4 = arith.constant 0 : index
    %3 = vector.load %arg2[%c0_2, %c0_3, %c0_4] : memref<1x16x128xf32, #tpu.memory_space<vmem>>, vector<1x16x128xf32>
    %4 = vector.broadcast %3 : vector<1x16x128xf32> to vector<2x16x128xf32>
    %5 = arith.addf %2, %4 : vector<2x16x128xf32>
    %c0_5 = arith.constant 0 : index
    %c0_6 = arith.constant 0 : index
    %c0_7 = arith.constant 0 : index
    %6 = vector.load %arg3[%c0_5, %c0_6, %c0_7] : memref<2x16x128xf32, #tpu.memory_space<vmem>>, vector<2x16x128xf32>
    tpu.vector_store %arg3[%c0_5, %c0_6, %c0_7], %5 {strides = array<i32>} : memref<2x16x128xf32, #tpu.memory_space<vmem>>, vector<2x16x128xf32>,
    return
  }
  func.func @transform_0(%arg0: i32) -> (i32, i32, i32) {
    %c0_i32 = arith.constant 0 : i32
    %c0_i32_0 = arith.constant 0 : i32
    %c0_i32_1 = arith.constant 0 : i32
    return %c0_i32, %arg0, %c0_i32_0 : i32, i32, i32
  }
  func.func @transform_1(%arg0: i32) -> (i32, i32, i32) {
    %c0_i32 = arith.constant 0 : i32
    %c0_i32_0 = arith.constant 0 : i32
    %c0_i32_1 = arith.constant 0 : i32
    return %c0_i32, %arg0, %c0_i32_0 : i32, i32, i32
  }
  func.func @transform_2(%arg0: i32) -> (i32, i32, i32) {
    %c0_i32 = arith.constant 0 : i32
    %c0_i32_0 = arith.constant 0 : i32
    %c0_i32_1 = arith.constant 0 : i32
    return %c0_i32, %arg0, %c0_i32_0 : i32, i32, i32
  }
}

</mosaic_0001>

<llo_original>
// kernel: tpu_custom_call.1
$region0: #{tpu_custom_call.1}
  #allocation0 [shape = 'u32[]', space=smem, size = 0x4, offset = 0x4, fixed_abs, tag = 'smem constant byte address 0x4 - core index']
  #allocation1 [shape = 'u32[72,128]{1,0:T(1,128)}', space=vmem, size = 0x9000, scoped, tag = 'internal scratch']
  %s0 = inlined_call_operand.hbm [shape: f32[2,16,128], index: 0, kind: input, shape index: {}]
  %s1 = inlined_call_operand.hbm [shape: f32[1,16,128], index: 1, kind: input, shape index: {}]
  %s2 = inlined_call_operand.hbm [shape: f32[2,16,128], index: 2, kind: output, shape index: {}]
  %s3 = sld [smem:[#allocation0]]
  $region26: #{tpu_custom_call.1} parent=0
    _
  %s5 = ssub.s32 1, %s3
  %s6 = scalar_select 0, %s5, %s3
  $region1: #{tpu_custom_call.1} parent=0
    #allocation2 [shape = 'u8[16384]{0}', space=vmem, size = 0x4000, scoped, tag = 'input window, operand 0, single buffered']
    #allocation3 [shape = 's32[1]{0}', space=sflag, size = 0x4, scoped, tag = 'scoped memory for tpu_custom_call.1']
    #allocation4 [shape = 's32[1]{0}', space=sflag, size = 0x4, scoped, tag = 'scoped memory for tpu_custom_call.1']
    #allocation5 [shape = 'u8[8192]{0}', space=vmem, size = 0x2000, scoped, tag = 'input window, operand 1, single buffered']
    #allocation6 [shape = 's32[1]{0}', space=sflag, size = 0x4, scoped, tag = 'scoped memory for tpu_custom_call.1']
    #allocation7 [shape = 'u8[16384]{0}', space=vmem, size = 0x4000, scoped, tag = 'output window, operand 0, single buffered']
    %7 = vsyncpa [#allocation3], 0
    %8 = vsyncpa [#allocation6], 0
    %9 = vsyncpa [#allocation4], 0
    // Predicated region
    $region2: #{tpu_custom_call.1} parent=1 // pred_check
      _
    $region3: #{tpu_custom_call.1} parent=1 // pred_check_branch
      %11 = sbr.rel (0) target = $region5
    $region4: #{tpu_custom_call.1} parent=1 // pred_region
      %13 = vsyncadd [#allocation3], 0
      %s14 = sshll.u32 %s0, 4
      %s15 = int_to_ptr.hbm [resolvable:$true] %s14
      %s16 = sshll.u32 [#allocation2], 4
      %s17 = int_to_ptr.vmem [resolvable:$true] %s16
      %22 = dma.hbm_to_vmem [thread:$0]  %s15, 512, %s17, [#allocation3], 128, 128, 8
    $region5: #{tpu_custom_call.1} parent=1 // pred_fallthru
      _
    // Predicated region
    $region6: #{tpu_custom_call.1} parent=1 // pred_check
      _
    $region7: #{tpu_custom_call.1} parent=1 // pred_check_branch
      %24 = sbr.rel (0) target = $region9
    $region8: #{tpu_custom_call.1} parent=1 // pred_region
      %26 = vsyncadd [#allocation6], 0
      %s27 = sshll.u32 %s1, 4
      %s28 = int_to_ptr.hbm [resolvable:$true] %s27
      %s29 = sshll.u32 [#allocation5], 4
      %s30 = int_to_ptr.vmem [resolvable:$true] %s29
      %35 = dma.hbm_to_vmem [thread:$0]  %s28, 256, %s30, [#allocation6], 128, 128, 8
    $region9: #{tpu_custom_call.1} parent=1 // pred_fallthru
      _
    // Predicated region
    $region10: #{tpu_custom_call.1} parent=1 // pred_check
      _
    $region11: #{tpu_custom_call.1} parent=1 // pred_check_branch
      %37 = sbr.rel (0) target = $region13
    $region12: #{tpu_custom_call.1} parent=1 // pred_region
      %39 = dma.done [#allocation3], 512
    $region13: #{tpu_custom_call.1} parent=1 // pred_fallthru
      _
    // Predicated region
    $region14: #{tpu_custom_call.1} parent=1 // pred_check
      _
    $region15: #{tpu_custom_call.1} parent=1 // pred_check_branch
      %41 = sbr.rel (0) target = $region17
    $region16: #{tpu_custom_call.1} parent=1 // pred_region
      %43 = dma.done [#allocation6], 256
    $region17: #{tpu_custom_call.1} parent=1 // pred_fallthru
      _
    %v44 = vld [vmem:[#allocation2] sm:$0xff]
    %v45 = vld [vmem:[#allocation2 + $0x8] sm:$0xff]
    %v46 = vld [vmem:[#allocation2 + $0x10] sm:$0xff]
    %v47 = vld [vmem:[#allocation2 + $0x18] sm:$0xff]
    %v48 = vmul.f32 %v44, 11.313708
    %v49 = vmul.f32 %v45, 11.313708
    %v50 = vmul.f32 %v46, 11.313708
    %v51 = vmul.f32 %v47, 11.313708
    %v52 = vld [vmem:[#allocation5] sm:$0xff]
    %v53 = vld [vmem:[#allocation5 + $0x8] sm:$0xff]
    %v54 = vadd.f32 %v48, %v52
    %v55 = vadd.f32 %v49, %v53
    %v56 = vadd.f32 %v50, %v52
    %v57 = vadd.f32 %v51, %v53
    %58 = vst [vmem:[#allocation7] sm:$0xff] %v54
    %59 = vst [vmem:[#allocation7 + $0x8] sm:$0xff] %v55
    %60 = vst [vmem:[#allocation7 + $0x10] sm:$0xff] %v56
    %61 = vst [vmem:[#allocation7 + $0x18] sm:$0xff] %v57
    // Predicated region
    $region18: #{tpu_custom_call.1} parent=1 // pred_check
      _
    $region19: #{tpu_custom_call.1} parent=1 // pred_check_branch
      %63 = sbr.rel (0) target = $region21
    $region20: #{tpu_custom_call.1} parent=1 // pred_region
      %65 = vsyncadd [#allocation4], 0
      %s66 = sshll.u32 [#allocation7], 4
      %s67 = int_to_ptr.vmem [resolvable:$true] %s66
      %s68 = sshll.u32 %s2, 4
      %s69 = int_to_ptr.hbm [resolvable:$true] %s68
      %74 = dma.vmem_to_hbm [thread:$0]  %s67, 512, %s69, [#allocation4], 128, 128, 8
    $region21: #{tpu_custom_call.1} parent=1 // pred_fallthru
      _
    // Predicated region
    $region22: #{tpu_custom_call.1} parent=1 // pred_check
      _
    $region23: #{tpu_custom_call.1} parent=1 // pred_check_branch
      %76 = sbr.rel (0) target = $region25
    $region24: #{tpu_custom_call.1} parent=1 // pred_region
      %78 = dma.done [#allocation4], 512
    $region25: #{tpu_custom_call.1} parent=1 // pred_fallthru
      _
    %79 = vsyncpa [#allocation3], 1
    %80 = vsyncpa [#allocation6], 1
    %81 = vsyncpa [#allocation4], 1

</llo_original>
